<compile_context>
chip_gen: v7x
topology: tpu7x:2x2x1
jax: 0.10.0
libtpu: 0.0.40
codegen_flags: <defaults>
</compile_context>

<pallas_src>
import functools
import math

import jax
import jax.numpy as jnp
from jax.experimental import pallas as pl
from jax.experimental.pallas import tpu as pltpu


def _round_up(x, m):
    return ((x + m - 1) // m) * m


def _device_config():
    """Per-generation tile defaults: (tm, th, lane align, VMEM budget, #TCs)."""
    kind = ""
    try:
        kind = (getattr(jax.devices()[0], "device_kind", "") or "").lower()
    except Exception:
        pass
    if ("v5 lite" in kind) or ("v5e" in kind) or ("v5lite" in kind):
        # 197 TF/s MXU, ~820 GB/s HBM: tm=256 already ~compute-bound; 4x128^2 MXU.
        return dict(tm=256, th=1024, align=128, vmem_cap=100 << 20, num_tc=1)
    if "v7" in kind:
        # 64 MiB VMEM, 2 TC/chip, 2x256^2 MXU: smaller th frees VMEM for big tm.
        return dict(tm=768, th=512, align=256, vmem_cap=56 << 20, num_tc=2)
    if "v6" in kind:
        # 918 TF/s MXU, 128 MiB VMEM, 2x256^2 MXU: big tm amortizes W1/W2 stream.
        return dict(tm=1024, th=1024, align=256, vmem_cap=100 << 20, num_tc=1)
    # Unknown backend (e.g. interpret mode): conservative.
    return dict(tm=512, th=512, align=128, vmem_cap=56 << 20, num_tc=1)


def _ffn_kernel(x_ref, g_ref, b_ref, w1_ref, b1_ref, w2_ref, b2_ref, o_ref,
                xn_ref, acc_ref, *, dim, approximate_gelu):
    """One (tm, dim_p) row tile x one (th,) hidden chunk.

    x_ref : (tm, dim_p)      token tile in matmul dtype (padded lanes zero)
    w1_ref: (dim_p, th)      W1 chunk, b1_ref: (1, th)
    w2_ref: (th, dim_p)      W2 chunk, b2_ref: (1, dim_p)
    xn_ref: (tm, dim_p)      scratch, LayerNormed tokens in matmul dtype
    acc_ref:(tm, dim_p) f32  scratch, output accumulator over hidden chunks
    """
    k = pl.program_id(1)

    # --- once per row tile: LayerNorm (f32 stats) + init accumulator ---
    @pl.when(k == 0)
    def _():
        x = x_ref[...].astype(jnp.float32)
        inv_dim = 1.0 / dim
        # Padded lanes (>= dim) are zero, so sum(x) and sum(x*x) are already
        # exact over the real dim; no iota/mask needed.  Padded lanes of xn
        # are zeroed by the zero-padded gamma/beta.
        mean = jnp.sum(x, axis=-1, keepdims=True) * inv_dim
        ex2 = jnp.sum(x * x, axis=-1, keepdims=True) * inv_dim
        var = ex2 - mean * mean
        xn = (x - mean) * jax.lax.rsqrt(var + 1e-5) * g_ref[...] + b_ref[...]
        xn_ref[...] = xn.astype(xn_ref.dtype)
        acc_ref[...] = jnp.zeros_like(acc_ref)

    # --- per hidden chunk: Linear -> GELU -> Linear, accumulate in f32 ---
    xn = xn_ref[...]
    h = jnp.dot(xn, w1_ref[...], preferred_element_type=jnp.float32)
    h = h + b1_ref[...]
    if approximate_gelu:
        # tanh-form GELU: transcendental goes to the EUP (its own VLIW slot)
        # instead of a long VALU erf polynomial over the full (tm, th) tile.
        c = math.sqrt(2.0 / math.pi)
        h = 0.5 * h * (1.0 + jnp.tanh(c * (h + 0.044715 * h * h * h)))
    else:
        # Exact (erf) GELU, matching nn.GELU() default.
        h = 0.5 * h * (1.0 + jax.lax.erf(h * (1.0 / math.sqrt(2.0))))
    acc_ref[...] += jnp.dot(h.astype(w2_ref.dtype), w2_ref[...],
                            preferred_element_type=jnp.float32)

    # --- once per row tile: add output bias, cast, store (lane-dense) ---
    @pl.when(k == pl.num_programs(1) - 1)
    def _():
        o_ref[...] = (acc_ref[...] + b2_ref[...]).astype(o_ref.dtype)


@functools.partial(jax.jit,
                   static_argnames=("tm", "th", "matmul_dtype", "approximate_gelu"))
def feed_forward(x, gamma, beta, w1, b1, w2, b2, *, tm=None, th=None,
                 matmul_dtype=jnp.bfloat16, approximate_gelu=False):
    """x: (batch, seq, dim). w1: (dim, hidden), w2: (hidden, dim).

    Returns (batch, seq, dim) in x.dtype.
    """
    batch, seq, dim = x.shape
    hidden = w1.shape[1]
    n = batch * seq

    cfg = _device_config()
    align = cfg["align"]
    tm = cfg["tm"] if tm is None else tm
    th = cfg["th"] if th is None else th

    # --- tile sizing ------------------------------------------------------
    dim_p = _round_up(dim, align)                           # MXU-aligned K/N
    th = _round_up(min(th, _round_up(hidden, align)), align)  # hidden chunk
    # Row tile: as large as requested / token count allows (>=16 sublanes so
    # bf16 tiles pack cleanly).  Large tm is the arithmetic-intensity lever:
    # W1/W2 are re-streamed per row tile.
    tm = _round_up(min(tm, _round_up(n, 16)), 16)
    # v7x has 2 TensorCores: make sure the "parallel" row axis has >=2 tiles
    # so both cores get work (only worth shrinking tm when 2 TCs exist).
    if cfg["num_tc"] >= 2 and n > 16 and _round_up(n, tm) // tm < 2:
        tm = max(16, min(tm, _round_up(pl.cdiv(n, 2), 16)))

    mm_sz = jnp.dtype(matmul_dtype).itemsize
    out_sz = jnp.dtype(x.dtype).itemsize

    def _vmem_est(tm_, th_):
        return (
            2 * tm_ * dim_p * mm_sz                      # x tile, double-buffered
            + 2 * tm_ * dim_p * out_sz                   # out tile, double-buffered
            + 2 * (dim_p * th_ + th_ * dim_p) * mm_sz    # W1/W2 chunks, double-buffered
            + 2 * (3 * dim_p + th_) * 4                  # gamma, beta, b2, b1
            + tm_ * dim_p * (mm_sz + 4)                  # xn + f32 acc scratch
            + tm_ * th_ * 4                              # f32 GELU intermediate h
        )

    # Fit the working set under the chip's VMEM budget: shrink th first (does
    # not hurt arithmetic intensity), then tm.
    budget = int(cfg["vmem_cap"] * 0.75)
    while _vmem_est(tm, th) > budget and th > align:
        th = _round_up(th // 2, align)
    while _vmem_est(tm, th) > budget and tm > 16:
        tm = _round_up(tm // 2, 16)

    hid_p = _round_up(hidden, th)
    n_p = _round_up(n, tm)

    vmem_limit = int(min(cfg["vmem_cap"],
                         max(_vmem_est(tm, th) * 1.3 + (2 << 20), 16 << 20)))

    # --- pad & cast operands ------------------------------------------------
    def pad2(a, r, c):
        return jnp.pad(a, ((0, r - a.shape[0]), (0, c - a.shape[1])))

    # x tile in matmul dtype halves input HBM traffic / VMEM for the bf16 path
    # (LayerNorm statistics are still computed in f32 inside the kernel).
    x2 = pad2(x.reshape(n, dim).astype(matmul_dtype), n_p, dim_p)
    g2 = pad2(gamma.reshape(1, dim).astype(jnp.float32), 1, dim_p)
    be2 = pad2(beta.reshape(1, dim).astype(jnp.float32), 1, dim_p)
    # TODO(synk): optional int8/fp8 weight quantization for weight-streaming-
    # bound (decode-like) regimes; kept bf16 here for accuracy parity.
    w1_p = pad2(w1.astype(matmul_dtype), dim_p, hid_p)
    b1_2 = pad2(b1.reshape(1, hidden).astype(jnp.float32), 1, hid_p)
    w2_p = pad2(w2.astype(matmul_dtype), hid_p, dim_p)
    b2_2 = pad2(b2.reshape(1, dim).astype(jnp.float32), 1, dim_p)

    grid = (n_p // tm, hid_p // th)

    # TODO(synk): when hid_p == th the W1/W2 block indices never change, so a
    # single-buffered pipeline_mode would halve their VMEM residency; left at
    # the default double-buffering for portability.
    out = pl.pallas_call(
        functools.partial(_ffn_kernel, dim=dim, approximate_gelu=approximate_gelu),
        out_shape=jax.ShapeDtypeStruct((n_p, dim_p), x.dtype),
        grid_spec=pltpu.PrefetchScalarGridSpec(
            num_scalar_prefetch=0,
            grid=grid,
            in_specs=[
                pl.BlockSpec((tm, dim_p), lambda i, k: (i, 0)),     # x tile
                pl.BlockSpec((1, dim_p), lambda i, k: (0, 0)),      # ln gamma
                pl.BlockSpec((1, dim_p), lambda i, k: (0, 0)),      # ln beta
                pl.BlockSpec((dim_p, th), lambda i, k: (0, k)),     # W1 chunk (in, out)
                pl.BlockSpec((1, th), lambda i, k: (0, k)),         # b1 chunk
                pl.BlockSpec((th, dim_p), lambda i, k: (k, 0)),     # W2 chunk (in, out)
                pl.BlockSpec((1, dim_p), lambda i, k: (0, 0)),      # b2
            ],
            out_specs=pl.BlockSpec((tm, dim_p), lambda i, k: (i, 0)),
            scratch_shapes=[
                pltpu.VMEM((tm, dim_p), matmul_dtype),   # cached LayerNorm output
                pltpu.VMEM((tm, dim_p), jnp.float32),    # f32 output accumulator
            ],
        ),
        compiler_params=pltpu.CompilerParams(
            dimension_semantics=("parallel", "arbitrary"),
            vmem_limit_bytes=vmem_limit,
        ),
    )(x2, g2, be2, w1_p, b1_2, w2_p, b2_2)

    return out[:n, :dim].reshape(batch, seq, dim)


def _reference(x, gamma, beta, w1, b1, w2, b2):
    xf = x.astype(jnp.float32)
    mean = jnp.mean(xf, axis=-1, keepdims=True)
    var = jnp.mean((xf - mean) ** 2, axis=-1, keepdims=True)
    xn = (xf - mean) / jnp.sqrt(var + 1e-5) * gamma + beta
    h = xn @ w1 + b1
    h = 0.5 * h * (1.0 + jax.lax.erf(h / jnp.sqrt(2.0)))
    return (h @ w2 + b2).astype(x.dtype)


if __name__ == "__main__":
    # Small shapes consistent with FeedForward(dim, hidden_dim)
    batch, seq, dim, hidden_dim = 2, 8, 32, 64

    key = jax.random.PRNGKey(0)
    kx, kg, kb, kw1, kb1, kw2, kb2 = jax.random.split(key, 7)

    x = jax.random.normal(kx, (batch, seq, dim), dtype=jnp.float32)

    # LayerNorm params (torch init: weight=1, bias=0; perturb slightly but
    # deterministically so the affine path is exercised)
    gamma = 1.0 + 0.01 * jax.random.normal(kg, (dim,), dtype=jnp.float32)
    beta = 0.01 * jax.random.normal(kb, (dim,), dtype=jnp.float32)

    # Linear params, stored as (in, out) for the kernel (x @ W + b)
    w1 = jax.random.normal(kw1, (dim, hidden_dim), dtype=jnp.float32) / math.sqrt(dim)
    b1 = 0.01 * jax.random.normal(kb1, (hidden_dim,), dtype=jnp.float32)
    w2 = jax.random.normal(kw2, (hidden_dim, dim), dtype=jnp.float32) / math.sqrt(hidden_dim)
    b2 = 0.01 * jax.random.normal(kb2, (dim,), dtype=jnp.float32)

    ref = _reference(x, gamma, beta, w1, b1, w2, b2)

    # 1) Exact-path check (f32 matmuls, erf GELU): validates LN/GELU/padding math.
    out_f32 = jax.block_until_ready(
        feed_forward(x, gamma, beta, w1, b1, w2, b2, matmul_dtype=jnp.float32))
    assert out_f32.shape == (batch, seq, dim)
    assert jnp.allclose(out_f32, ref, atol=1e-4, rtol=1e-4), "f32 path mismatch vs reference"

    # 2) Fast path (default): bf16 operands, f32 accumulation, exact erf GELU.
    out_bf16 = jax.block_until_ready(feed_forward(x, gamma, beta, w1, b1, w2, b2))
    assert out_bf16.shape == (batch, seq, dim)
    assert jnp.allclose(out_bf16, ref, atol=5e-2, rtol=5e-2), "bf16 path mismatch vs reference"

    # 3) EUP GELU path (tanh approximation) for v6e/v7x inner-loop throughput.
    out_approx = jax.block_until_ready(
        feed_forward(x, gamma, beta, w1, b1, w2, b2, approximate_gelu=True))
    assert out_approx.shape == (batch, seq, dim)
    assert jnp.allclose(out_approx, ref, atol=1e-1, rtol=1e-1), "approx-GELU path mismatch"

    print("KERNEL_OK")
</pallas_src>

<mosaic_0001>
module attributes {stable_mosaic.version = 11 : i64} {
  func.func @_ffn_kernel(%arg0: i32, %arg1: i32, %arg2: memref<16x128xf32, #tpu.memory_space<vmem>>, %arg3: memref<1x128xf32, #tpu.memory_space<vmem>>, %arg4: memref<1x128xf32, #tpu.memory_space<vmem>>, %arg5: memref<128x128xf32, #tpu.memory_space<vmem>>, %arg6: memref<1x128xf32, #tpu.memory_space<vmem>>, %arg7: memref<128x128xf32, #tpu.memory_space<vmem>>, %arg8: memref<1x128xf32, #tpu.memory_space<vmem>>, %arg9: memref<16x128xf32, #tpu.memory_space<vmem>>, %arg10: memref<16x128xf32, #tpu.memory_space<vmem>>, %arg11: memref<16x128xf32, #tpu.memory_space<vmem>>) attributes {dimension_semantics = [#tpu.dimension_semantics<parallel>, #tpu.dimension_semantics<arbitrary>], iteration_bounds = array<i64: 1, 1>, scalar_prefetch = 0 : i64, scratch_operands = 2 : i64, tpu.core_type = #tpu.core_type<tc>, window_params = [{transform_indices = @transform_0, window_bounds = array<i64: 16, 128>}, {pipeline_mode = #tpu.pipeline_mode<synchronous>, transform_indices = @transform_1, window_bounds = array<i64: 1, 128>}, {pipeline_mode = #tpu.pipeline_mode<synchronous>, transform_indices = @transform_2, window_bounds = array<i64: 1, 128>}, {transform_indices = @transform_3, window_bounds = array<i64: 128, 128>}, {transform_indices = @transform_4, window_bounds = array<i64: 1, 128>}, {transform_indices = @transform_5, window_bounds = array<i64: 128, 128>}, {pipeline_mode = #tpu.pipeline_mode<synchronous>, transform_indices = @transform_6, window_bounds = array<i64: 1, 128>}, {transform_indices = @transform_7, window_bounds = array<i64: 16, 128>}]} {
    %c0_i32 = arith.constant 0 : i32
    %0 = arith.cmpi eq, %arg1, %c0_i32 : i32
    %1 = arith.extui %0 : i1 to i32
    %c0_i32_0 = arith.constant 0 : i32
    %2 = arith.cmpi ne, %1, %c0_i32_0 : i32
    scf.if %2 {
      %c0_18 = arith.constant 0 : index
      %c0_19 = arith.constant 0 : index
      %25 = vector.load %arg2[%c0_18, %c0_19] : memref<16x128xf32, #tpu.memory_space<vmem>>, vector<16x128xf32>
      %cst_20 = arith.constant dense<0.000000e+00> : vector<16xf32>
      %26 = vector.multi_reduction <add>, %25, %cst_20 [1] : vector<16x128xf32> to vector<16xf32>
      %27 = vector.shape_cast %26 : vector<16xf32> to vector<16x1xf32>
      %cst_21 = arith.constant 3.125000e-02 : f32
      %28 = vector.broadcast %cst_21 : f32 to vector<16x1xf32>
      %29 = arith.mulf %27, %28 : vector<16x1xf32>
      %30 = arith.mulf %25, %25 : vector<16x128xf32>
      %cst_22 = arith.constant dense<0.000000e+00> : vector<16xf32>
      %31 = vector.multi_reduction <add>, %30, %cst_22 [1] : vector<16x128xf32> to vector<16xf32>
      %32 = vector.shape_cast %31 : vector<16xf32> to vector<16x1xf32>
      %cst_23 = arith.constant 3.125000e-02 : f32
      %33 = vector.broadcast %cst_23 : f32 to vector<16x1xf32>
      %34 = arith.mulf %32, %33 : vector<16x1xf32>
      %35 = arith.mulf %29, %29 : vector<16x1xf32>
      %36 = arith.subf %34, %35 : vector<16x1xf32>
      %37 = vector.broadcast %29 : vector<16x1xf32> to vector<16x128xf32>
      %38 = arith.subf %25, %37 : vector<16x128xf32>
      %cst_24 = arith.constant 9.99999974E-6 : f32
      %39 = vector.broadcast %cst_24 : f32 to vector<16x1xf32>
      %40 = arith.addf %36, %39 : vector<16x1xf32>
      %41 = math.rsqrt %40 : vector<16x1xf32>
      %42 = vector.broadcast %41 : vector<16x1xf32> to vector<16x128xf32>
      %43 = arith.mulf %38, %42 : vector<16x128xf32>
      %c0_25 = arith.constant 0 : index
      %c0_26 = arith.constant 0 : index
      %44 = vector.load %arg3[%c0_25, %c0_26] : memref<1x128xf32, #tpu.memory_space<vmem>>, vector<1x128xf32>
      %45 = vector.broadcast %44 : vector<1x128xf32> to vector<16x128xf32>
      %46 = arith.mulf %43, %45 : vector<16x128xf32>
      %c0_27 = arith.constant 0 : index
      %c0_28 = arith.constant 0 : index
      %47 = vector.load %arg4[%c0_27, %c0_28] : memref<1x128xf32, #tpu.memory_space<vmem>>, vector<1x128xf32>
      %48 = vector.broadcast %47 : vector<1x128xf32> to vector<16x128xf32>
      %49 = arith.addf %46, %48 : vector<16x128xf32>
      %c0_29 = arith.constant 0 : index
      %c0_30 = arith.constant 0 : index
      %50 = vector.load %arg10[%c0_29, %c0_30] : memref<16x128xf32, #tpu.memory_space<vmem>>, vector<16x128xf32>
      tpu.vector_store %arg10[%c0_29, %c0_30], %49 {strides = array<i32>} : memref<16x128xf32, #tpu.memory_space<vmem>>, vector<16x128xf32>,
      %cst_31 = arith.constant 0.000000e+00 : f32
      %51 = vector.broadcast %cst_31 : f32 to vector<16x128xf32>
      %c0_32 = arith.constant 0 : index
      %c0_33 = arith.constant 0 : index
      %52 = vector.load %arg11[%c0_32, %c0_33] : memref<16x128xf32, #tpu.memory_space<vmem>>, vector<16x128xf32>
      tpu.vector_store %arg11[%c0_32, %c0_33], %51 {strides = array<i32>} : memref<16x128xf32, #tpu.memory_space<vmem>>, vector<16x128xf32>,
    } else {
    }
    %c0 = arith.constant 0 : index
    %c0_1 = arith.constant 0 : index
    %3 = vector.load %arg10[%c0, %c0_1] : memref<16x128xf32, #tpu.memory_space<vmem>>, vector<16x128xf32>
    %c0_2 = arith.constant 0 : index
    %c0_3 = arith.constant 0 : index
    %4 = vector.load %arg5[%c0_2, %c0_3] : memref<128x128xf32, #tpu.memory_space<vmem>>, vector<128x128xf32>
    %cst = arith.constant dense<0.000000e+00> : vector<16x128xf32>
    %5 = tpu.matmul %3, %4, %cst {dimension_numbers = #tpu.dot_dimension_numbers<[1], [0], [0], [1], [0, 0, 1, 1], [], []>} : vector<16x128xf32>, vector<128x128xf32>, vector<16x128xf32> -> vector<16x128xf32>
    %c0_4 = arith.constant 0 : index
    %c0_5 = arith.constant 0 : index
    %6 = vector.load %arg6[%c0_4, %c0_5] : memref<1x128xf32, #tpu.memory_space<vmem>>, vector<1x128xf32>
    %7 = vector.broadcast %6 : vector<1x128xf32> to vector<16x128xf32>
    %8 = arith.addf %5, %7 : vector<16x128xf32>
    %cst_6 = arith.constant 5.000000e-01 : f32
    %9 = vector.broadcast %cst_6 : f32 to vector<16x128xf32>
    %10 = arith.mulf %9, %8 : vector<16x128xf32>
    %cst_7 = arith.constant 0.707106769 : f32
    %11 = vector.broadcast %cst_7 : f32 to vector<16x128xf32>
    %12 = arith.mulf %8, %11 : vector<16x128xf32>
    %13 = math.erf %12 : vector<16x128xf32>
    %cst_8 = arith.constant 1.000000e+00 : f32
    %14 = vector.broadcast %cst_8 : f32 to vector<16x128xf32>
    %15 = arith.addf %14, %13 : vector<16x128xf32>
    %16 = arith.mulf %10, %15 : vector<16x128xf32>
    %c0_9 = arith.constant 0 : index
    %c0_10 = arith.constant 0 : index
    %17 = vector.load %arg11[%c0_9, %c0_10] : memref<16x128xf32, #tpu.memory_space<vmem>>, vector<16x128xf32>
    %c0_11 = arith.constant 0 : index
    %c0_12 = arith.constant 0 : index
    %18 = vector.load %arg7[%c0_11, %c0_12] : memref<128x128xf32, #tpu.memory_space<vmem>>, vector<128x128xf32>
    %cst_13 = arith.constant dense<0.000000e+00> : vector<16x128xf32>
    %19 = tpu.matmul %16, %18, %cst_13 {dimension_numbers = #tpu.dot_dimension_numbers<[1], [0], [0], [1], [0, 0, 1, 1], [], []>} : vector<16x128xf32>, vector<128x128xf32>, vector<16x128xf32> -> vector<16x128xf32>
    %20 = arith.addf %17, %19 : vector<16x128xf32>
    %c0_14 = arith.constant 0 : index
    %c0_15 = arith.constant 0 : index
    %21 = vector.load %arg11[%c0_14, %c0_15] : memref<16x128xf32, #tpu.memory_space<vmem>>, vector<16x128xf32>
    tpu.vector_store %arg11[%c0_14, %c0_15], %20 {strides = array<i32>} : memref<16x128xf32, #tpu.memory_space<vmem>>, vector<16x128xf32>,
    %c0_i32_16 = arith.constant 0 : i32
    %22 = arith.cmpi eq, %arg1, %c0_i32_16 : i32
    %23 = arith.extui %22 : i1 to i32
    %c0_i32_17 = arith.constant 0 : i32
    %24 = arith.cmpi ne, %23, %c0_i32_17 : i32
    scf.if %24 {
      %c0_18 = arith.constant 0 : index
      %c0_19 = arith.constant 0 : index
      %25 = vector.load %arg11[%c0_18, %c0_19] : memref<16x128xf32, #tpu.memory_space<vmem>>, vector<16x128xf32>
      %c0_20 = arith.constant 0 : index
      %c0_21 = arith.constant 0 : index
      %26 = vector.load %arg8[%c0_20, %c0_21] : memref<1x128xf32, #tpu.memory_space<vmem>>, vector<1x128xf32>
      %27 = vector.broadcast %26 : vector<1x128xf32> to vector<16x128xf32>
      %28 = arith.addf %25, %27 : vector<16x128xf32>
      %c0_22 = arith.constant 0 : index
      %c0_23 = arith.constant 0 : index
      %29 = vector.load %arg9[%c0_22, %c0_23] : memref<16x128xf32, #tpu.memory_space<vmem>>, vector<16x128xf32>
      tpu.vector_store %arg9[%c0_22, %c0_23], %28 {strides = array<i32>} : memref<16x128xf32, #tpu.memory_space<vmem>>, vector<16x128xf32>,
    } else {
    }
    return
  }
  func.func @transform_0(%arg0: i32, %arg1: i32) -> (i32, i32) {
    %c0_i32 = arith.constant 0 : i32
    %c0_i32_0 = arith.constant 0 : i32
    return %arg0, %c0_i32 : i32, i32
  }
  func.func @transform_1(%arg0: i32, %arg1: i32) -> (i32, i32) {
    %c0_i32 = arith.constant 0 : i32
    %c0_i32_0 = arith.constant 0 : i32
    %c0_i32_1 = arith.constant 0 : i32
    return %c0_i32, %c0_i32_0 : i32, i32
  }
  func.func @transform_2(%arg0: i32, %arg1: i32) -> (i32, i32) {
    %c0_i32 = arith.constant 0 : i32
    %c0_i32_0 = arith.constant 0 : i32
    %c0_i32_1 = arith.constant 0 : i32
    return %c0_i32, %c0_i32_0 : i32, i32
  }
  func.func @transform_3(%arg0: i32, %arg1: i32) -> (i32, i32) {
    %c0_i32 = arith.constant 0 : i32
    %c0_i32_0 = arith.constant 0 : i32
    return %c0_i32, %arg1 : i32, i32
  }
  func.func @transform_4(%arg0: i32, %arg1: i32) -> (i32, i32) {
    %c0_i32 = arith.constant 0 : i32
    %c0_i32_0 = arith.constant 0 : i32
    return %c0_i32, %arg1 : i32, i32
  }
  func.func @transform_5(%arg0: i32, %arg1: i32) -> (i32, i32) {
    %c0_i32 = arith.constant 0 : i32
    %c0_i32_0 = arith.constant 0 : i32
    return %arg1, %c0_i32 : i32, i32
  }
  func.func @transform_6(%arg0: i32, %arg1: i32) -> (i32, i32) {
    %c0_i32 = arith.constant 0 : i32
    %c0_i32_0 = arith.constant 0 : i32
    %c0_i32_1 = arith.constant 0 : i32
    return %c0_i32, %c0_i32_0 : i32, i32
  }
  func.func @transform_7(%arg0: i32, %arg1: i32) -> (i32, i32) {
    %c0_i32 = arith.constant 0 : i32
    %c0_i32_0 = arith.constant 0 : i32
    return %arg0, %c0_i32 : i32, i32
  }
}

</mosaic_0001>

<llo_original>
// kernel: feed_forward.1
$region0: #{feed_forward.1}
  #allocation0 [shape = 'u32[]', space=smem, size = 0x4, offset = 0x4, fixed_abs, tag = 'smem constant byte address 0x4 - core index']
  #allocation1 [shape = 'u32[144,128]{1,0:T(1,128)}', space=vmem, size = 0x12000, scoped, tag = 'internal scratch']
  #allocation2 [shape = 'f32[16,128]{1,0:T(8,128)}', space=vmem, size = 0x2000, scoped, tag = 'scratch operand']
  #allocation3 [shape = 'f32[16,128]{1,0:T(8,128)}', space=vmem, size = 0x2000, scoped, tag = 'scratch operand']
  %s0 = inlined_call_operand.vmem [shape: f32[16,128], index: 0, kind: input, shape index: {}]
  %s1 = inlined_call_operand.vmem [shape: f32[1,128], index: 1, kind: input, shape index: {}]
  %s2 = inlined_call_operand.vmem [shape: f32[1,128], index: 2, kind: input, shape index: {}]
  %s3 = inlined_call_operand.vmem [shape: f32[128,128], index: 3, kind: input, shape index: {}]
  %s4 = inlined_call_operand.vmem [shape: f32[1,128], index: 4, kind: input, shape index: {}]
  %s5 = inlined_call_operand.vmem [shape: f32[128,128], index: 5, kind: input, shape index: {}]
  %s6 = inlined_call_operand.vmem [shape: f32[1,128], index: 6, kind: input, shape index: {}]
  %s7 = inlined_call_operand.vmem [shape: f32[16,128], index: 7, kind: output, shape index: {}]
  %s8 = sld [smem:[#allocation0]]
  $region46: #{feed_forward.1} parent=0
    _
  %s10 = ssub.s32 1, %s8
  %s11 = scalar_select 0, %s10, %s8
  // Predicated region
  $region2: #{feed_forward.1} parent=0 // pred_check
    _
  $region3: #{feed_forward.1} parent=0 // pred_check_branch
    %13 = sbr.rel (0) target = $region5
  $region4: #{feed_forward.1} parent=0 // pred_region
    _
  $region5: #{feed_forward.1} parent=0 // pred_fallthru
    _
  // Predicated region
  $region6: #{feed_forward.1} parent=0 // pred_check
    _
  $region7: #{feed_forward.1} parent=0 // pred_check_branch
    %15 = sbr.rel (0) target = $region9
  $region8: #{feed_forward.1} parent=0 // pred_region
    _
  $region9: #{feed_forward.1} parent=0 // pred_fallthru
    _
  // Predicated region
  $region10: #{feed_forward.1} parent=0 // pred_check
    _
  $region11: #{feed_forward.1} parent=0 // pred_check_branch
    %17 = sbr.rel (0) target = $region13
  $region12: #{feed_forward.1} parent=0 // pred_region
    _
  $region13: #{feed_forward.1} parent=0 // pred_fallthru
    _
  // Predicated region
  $region14: #{feed_forward.1} parent=0 // pred_check
    _
  $region15: #{feed_forward.1} parent=0 // pred_check_branch
    %19 = sbr.rel (0) target = $region17
  $region16: #{feed_forward.1} parent=0 // pred_region
    _
  $region17: #{feed_forward.1} parent=0 // pred_fallthru
    _
  // Predicated region
  $region18: #{feed_forward.1} parent=0 // pred_check
    _
  $region19: #{feed_forward.1} parent=0 // pred_check_branch
    %21 = sbr.rel (0) target = $region21
  $region20: #{feed_forward.1} parent=0 // pred_region
    _
  $region21: #{feed_forward.1} parent=0 // pred_fallthru
    _
  // Predicated region
  $region22: #{feed_forward.1} parent=0 // pred_check
    _
  $region23: #{feed_forward.1} parent=0 // pred_check_branch
    %23 = sbr.rel (0) target = $region25
  $region24: #{feed_forward.1} parent=0 // pred_region
    _
  $region25: #{feed_forward.1} parent=0 // pred_fallthru
    _
  // Predicated region
  $region26: #{feed_forward.1} parent=0 // pred_check
    _
  $region27: #{feed_forward.1} parent=0 // pred_check_branch
    %25 = sbr.rel (0) target = $region29
  $region28: #{feed_forward.1} parent=0 // pred_region
    _
  $region29: #{feed_forward.1} parent=0 // pred_fallthru
    _
  %p26 = scmp.eq.s32.totalorder 0, 0
  // Predicated region
  $region30: #{feed_forward.1} parent=0 // pred_check
    %p27 = pneg %p26
  $region31: #{feed_forward.1} parent=0 // pred_check_branch
    %29 = sbr.rel (%p27) target = $region33
  $region32: #{feed_forward.1} parent=0 // pred_region
    %v30 = vld [vmem:[%s0] sm:$0xff]
    %v31 = vld [vmem:[%s0 + $0x8] sm:$0xff]
    %32 = vadd.xlane.f32.xlu0 %v30
    %v33 = vpop.xlane.xlu0 %32
    %34 = vadd.xlane.f32.xlu0 %v31
    %v35 = vpop.xlane.xlu0 %34
    %v36 = vmul.f32 %v33, 0.03125
    %v37 = vmul.f32 %v35, 0.03125
    %v38 = vmul.f32 %v30, %v30
    %v39 = vmul.f32 %v31, %v31
    %40 = vadd.xlane.f32.xlu0 %v38
    %v41 = vpop.xlane.xlu0 %40
    %42 = vadd.xlane.f32.xlu0 %v39
    %v43 = vpop.xlane.xlu0 %42
    %v44 = vmul.f32 %v41, 0.03125
    %v45 = vmul.f32 %v43, 0.03125
    %v46 = vmul.f32 %v36, %v36
    %v47 = vmul.f32 %v37, %v37
    %v48 = vsub.f32 %v44, %v46
    %v49 = vsub.f32 %v45, %v47
    %v50 = vsub.f32 %v30, %v36
    %v51 = vsub.f32 %v31, %v37
    %v52 = vadd.f32 %v48, 1e-05
    %v53 = vadd.f32 %v49, 1e-05
    %v54 = vrsqrt.pop %v52
    %v55 = vrsqrt.pop %v53
    %v56 = vmul.f32 %v50, %v54
    %v57 = vmul.f32 %v51, %v55
    %v58 = vld [vmem:[%s1] sm:$0x1]
    %v60 = vlaneseq
    %v61 = vshrl.u32 %v60, 7
    %v62 = vsub.s32 0, %v61
    %v63 = vrot.slane %v58, %v62
    %v65 = vmul.f32 %v56, %v63
    %v66 = vmul.f32 %v57, %v63
    %v67 = vld [vmem:[%s2] sm:$0x1]
    %v69 = vlaneseq
    %v70 = vshrl.u32 %v69, 7
    %v71 = vsub.s32 0, %v70
    %v72 = vrot.slane %v67, %v71
    %v74 = vadd.f32 %v65, %v72
    %v75 = vadd.f32 %v66, %v72
    %76 = vst [vmem:[#allocation2] sm:$0xff] %v74
    %77 = vst [vmem:[#allocation2 + $0x8] sm:$0xff] %v75
    %78 = vst [vmem:[#allocation3] sm:$0xff] 0.0
    %79 = vst [vmem:[#allocation3 + $0x8] sm:$0xff] 0.0
  $region33: #{feed_forward.1} parent=0 // pred_fallthru
    _
  %v80 = vld [vmem:[#allocation2] sm:$0xff]
  %v81 = vld [vmem:[#allocation2 + $0x8] sm:$0xff]
  %v82 = vld [vmem:[%s3] sm:$0xff]
  %v83 = vld [vmem:[%s3 + $0x8] sm:$0xff]
  %v84 = vld [vmem:[%s3 + $0x10] sm:$0xff]
  %v85 = vld [vmem:[%s3 + $0x18] sm:$0xff]
  %v86 = vld [vmem:[%s3 + $0x20] sm:$0xff]
  %v87 = vld [vmem:[%s3 + $0x28] sm:$0xff]
  %v88 = vld [vmem:[%s3 + $0x30] sm:$0xff]
  %v89 = vld [vmem:[%s3 + $0x38] sm:$0xff]
  %v90 = vld [vmem:[%s3 + $0x40] sm:$0xff]
  %v91 = vld [vmem:[%s3 + $0x48] sm:$0xff]
  %v92 = vld [vmem:[%s3 + $0x50] sm:$0xff]
  %v93 = vld [vmem:[%s3 + $0x58] sm:$0xff]
  %v94 = vld [vmem:[%s3 + $0x60] sm:$0xff]
  %v95 = vld [vmem:[%s3 + $0x68] sm:$0xff]
  %v96 = vld [vmem:[%s3 + $0x70] sm:$0xff]
  %v97 = vld [vmem:[%s3 + $0x78] sm:$0xff]
  %v98 = vld [vmem:[%s4] sm:$0x1]
  %v100 = vlaneseq
  %v101 = vshrl.u32 %v100, 7
  %v102 = vsub.s32 0, %v101
  %v103 = vrot.slane %v98, %v102
  %105 = vmatprep.subr.mxu0 0.0
  %106 = vmatpush1.msra.mxu0 %v82
  %107 = vmatprep.subr.mxu0 0.0
  %108 = vmatpush1.msra.mxu0 %v83
  %109 = vmatprep.subr.mxu0 0.0
  %110 = vmatpush1.msra.mxu0 %v84
  %111 = vmatprep.subr.mxu0 0.0
  %112 = vmatpush1.msra.mxu0 %v85
  %113 = vmatprep.subr.mxu0 0.0
  %114 = vmatpush1.msra.mxu0 %v86
  %115 = vmatprep.subr.mxu0 0.0
  %116 = vmatpush1.msra.mxu0 %v87
  %117 = vmatprep.subr.mxu0 0.0
  %118 = vmatpush1.msra.mxu0 %v88
  %119 = vmatprep.subr.mxu0 0.0
  %120 = vmatpush1.msra.mxu0 %v89
  %121 = vmatprep.subr.mxu0 0.0
  %122 = vmatpush1.msra.mxu0 %v90
  %123 = vmatprep.subr.mxu0 0.0
  %124 = vmatpush1.msra.mxu0 %v91
  %125 = vmatprep.subr.mxu0 0.0
  %126 = vmatpush1.msra.mxu0 %v92
  %127 = vmatprep.subr.mxu0 0.0
  %128 = vmatpush1.msra.mxu0 %v93
  %129 = vmatprep.subr.mxu0 0.0
  %130 = vmatpush1.msra.mxu0 %v94
  %131 = vmatprep.subr.mxu0 0.0
  %132 = vmatpush1.msra.mxu0 %v95
  %133 = vmatprep.subr.mxu0 0.0
  %134 = vmatpush1.msra.mxu0 %v96
  %135 = vmatprep.subr.mxu0 0.0
  %136 = vmatpush1.msra.mxu0 %v97
  %137 = vmatprep.subr.mxu0 0.0
  %138 = vmatpush1.msra.mxu0 0.0
  %139 = vmatprep.subr.mxu0 0.0
  %140 = vmatpush1.msra.mxu0 0.0
  %141 = vmatprep.subr.mxu0 0.0
  %142 = vmatpush1.msra.mxu0 0.0
  %143 = vmatprep.subr.mxu0 0.0
  %144 = vmatpush1.msra.mxu0 0.0
  %145 = vmatprep.subr.mxu0 0.0
  %146 = vmatpush1.msra.mxu0 0.0
  %147 = vmatprep.subr.mxu0 0.0
  %148 = vmatpush1.msra.mxu0 0.0
  %149 = vmatprep.subr.mxu0 0.0
  %150 = vmatpush1.msra.mxu0 0.0
  %151 = vmatprep.subr.mxu0 0.0
  %152 = vmatpush1.msra.mxu0 0.0
  %153 = vmatprep.subr.mxu0 0.0
  %154 = vmatpush1.msra.mxu0 0.0
  %155 = vmatprep.subr.mxu0 0.0
  %156 = vmatpush1.msra.mxu0 0.0
  %157 = vmatprep.subr.mxu0 0.0
  %158 = vmatpush1.msra.mxu0 0.0
  %159 = vmatprep.subr.mxu0 0.0
  %160 = vmatpush1.msra.mxu0 0.0
  %161 = vmatprep.subr.mxu0 0.0
  %162 = vmatpush1.msra.mxu0 0.0
  %163 = vmatprep.subr.mxu0 0.0
  %164 = vmatpush1.msra.mxu0 0.0
  %165 = vmatprep.subr.mxu0 0.0
  %166 = vmatpush1.msra.mxu0 0.0
  %167 = vmatprep.subr.mxu0 0.0
  %168 = vmatpush1.msra.mxu0 0.0
  %169 = vmatprep.mubr.f32.mxu0 0.0
  %170 = vmatmul.mubr.f32.gmra.mrb[0].mxu0 %v80
  %v171 = vpop.f32.mrb[0].mxu0
  %v172 = vadd.f32 %v103, %v171
  %v173 = vpop.f32.mrb[0].mxu0
  %174 = vmatprep.mubr.f32.mxu0 0.0
  %175 = vmatmul.mubr.f32.gmra.mrb[0].mxu0 %v81
  %v176 = vpop.f32.mrb[0].mxu0
  %v177 = vadd.f32 %v103, %v176
  %v178 = vpop.f32.mrb[0].mxu0
  %179 = vdwg.mxu0
  %v180 = vmul.f32 %v172, 0.5
  %v181 = vmul.f32 %v177, 0.5
  %v182 = vmul.f32 %v172, 0.70710677
  %v183 = vmul.f32 %v177, 0.70710677
  %v184 = verf.f32.pop %v182
  %v185 = verf.f32.pop %v183
  %v186 = vadd.f32 %v184, 1.0
  %v187 = vadd.f32 %v185, 1.0
  %v188 = vmul.f32 %v180, %v186
  %v189 = vmul.f32 %v181, %v187
  %v190 = vld [vmem:[#allocation3] sm:$0xff]
  %v191 = vld [vmem:[#allocation3 + $0x8] sm:$0xff]
  %v192 = vld [vmem:[%s5] sm:$0xff]
  %v193 = vld [vmem:[%s5 + $0x8] sm:$0xff]
  %v194 = vld [vmem:[%s5 + $0x10] sm:$0xff]
  %v195 = vld [vmem:[%s5 + $0x18] sm:$0xff]
  %v196 = vld [vmem:[%s5 + $0x20] sm:$0xff]
  %v197 = vld [vmem:[%s5 + $0x28] sm:$0xff]
  %v198 = vld [vmem:[%s5 + $0x30] sm:$0xff]
  %v199 = vld [vmem:[%s5 + $0x38] sm:$0xff]
  %v200 = vld [vmem:[%s5 + $0x40] sm:$0xff]
  %v201 = vld [vmem:[%s5 + $0x48] sm:$0xff]
  %v202 = vld [vmem:[%s5 + $0x50] sm:$0xff]
  %v203 = vld [vmem:[%s5 + $0x58] sm:$0xff]
  %v204 = vld [vmem:[%s5 + $0x60] sm:$0xff]
  %v205 = vld [vmem:[%s5 + $0x68] sm:$0xff]
  %v206 = vld [vmem:[%s5 + $0x70] sm:$0xff]
  %v207 = vld [vmem:[%s5 + $0x78] sm:$0xff]
  %208 = vmatprep.subr.mxu0 0.0
  %209 = vmatpush1.msra.mxu0 %v192
  %210 = vmatprep.subr.mxu0 0.0
  %211 = vmatpush1.msra.mxu0 %v193
  %212 = vmatprep.subr.mxu0 0.0
  %213 = vmatpush1.msra.mxu0 %v194
  %214 = vmatprep.subr.mxu0 0.0
  %215 = vmatpush1.msra.mxu0 %v195
  %216 = vmatprep.subr.mxu0 0.0
  %217 = vmatpush1.msra.mxu0 %v196
  %218 = vmatprep.subr.mxu0 0.0
  %219 = vmatpush1.msra.mxu0 %v197
  %220 = vmatprep.subr.mxu0 0.0
  %221 = vmatpush1.msra.mxu0 %v198
  %222 = vmatprep.subr.mxu0 0.0
  %223 = vmatpush1.msra.mxu0 %v199
  %224 = vmatprep.subr.mxu0 0.0
  %225 = vmatpush1.msra.mxu0 %v200
  %226 = vmatprep.subr.mxu0 0.0
  %227 = vmatpush1.msra.mxu0 %v201
  %228 = vmatprep.subr.mxu0 0.0
  %229 = vmatpush1.msra.mxu0 %v202
  %230 = vmatprep.subr.mxu0 0.0
  %231 = vmatpush1.msra.mxu0 %v203
  %232 = vmatprep.subr.mxu0 0.0
  %233 = vmatpush1.msra.mxu0 %v204
  %234 = vmatprep.subr.mxu0 0.0
  %235 = vmatpush1.msra.mxu0 %v205
  %236 = vmatprep.subr.mxu0 0.0
  %237 = vmatpush1.msra.mxu0 %v206
  %238 = vmatprep.subr.mxu0 0.0
  %239 = vmatpush1.msra.mxu0 %v207
  %240 = vmatprep.subr.mxu0 0.0
  %241 = vmatpush1.msra.mxu0 0.0
  %242 = vmatprep.subr.mxu0 0.0
  %243 = vmatpush1.msra.mxu0 0.0
  %244 = vmatprep.subr.mxu0 0.0
  %245 = vmatpush1.msra.mxu0 0.0
  %246 = vmatprep.subr.mxu0 0.0
  %247 = vmatpush1.msra.mxu0 0.0
  %248 = vmatprep.subr.mxu0 0.0
  %249 = vmatpush1.msra.mxu0 0.0
  %250 = vmatprep.subr.mxu0 0.0
  %251 = vmatpush1.msra.mxu0 0.0
  %252 = vmatprep.subr.mxu0 0.0
  %253 = vmatpush1.msra.mxu0 0.0
  %254 = vmatprep.subr.mxu0 0.0
  %255 = vmatpush1.msra.mxu0 0.0
  %256 = vmatprep.subr.mxu0 0.0
  %257 = vmatpush1.msra.mxu0 0.0
  %258 = vmatprep.subr.mxu0 0.0
  %259 = vmatpush1.msra.mxu0 0.0
  %260 = vmatprep.subr.mxu0 0.0
  %261 = vmatpush1.msra.mxu0 0.0
  %262 = vmatprep.subr.mxu0 0.0
  %263 = vmatpush1.msra.mxu0 0.0
  %264 = vmatprep.subr.mxu0 0.0
  %265 = vmatpush1.msra.mxu0 0.0
  %266 = vmatprep.subr.mxu0 0.0
  %267 = vmatpush1.msra.mxu0 0.0
  %268 = vmatprep.subr.mxu0 0.0
  %269 = vmatpush1.msra.mxu0 0.0
  %270 = vmatprep.subr.mxu0 0.0
  %271 = vmatpush1.msra.mxu0 0.0
  %272 = vmatprep.mubr.f32.mxu0 0.0
  %273 = vmatmul.mubr.f32.gmra.mrb[0].mxu0 %v188
  %v274 = vpop.f32.mrb[0].mxu0
  %v275 = vadd.f32 0.0, %v274
  %v276 = vpop.f32.mrb[0].mxu0
  %277 = vmatprep.mubr.f32.mxu0 0.0
  %278 = vmatmul.mubr.f32.gmra.mrb[0].mxu0 %v189
  %v279 = vpop.f32.mrb[0].mxu0
  %v280 = vadd.f32 0.0, %v279
  %v281 = vpop.f32.mrb[0].mxu0
  %282 = vdwg.mxu0
  %v283 = vadd.f32 %v190, %v275
  %v284 = vadd.f32 %v191, %v280
  %285 = vst [vmem:[#allocation3] sm:$0xff] %v283
  %286 = vst [vmem:[#allocation3 + $0x8] sm:$0xff] %v284
  // Predicated region
  $region34: #{feed_forward.1} parent=0 // pred_check
    %p287 = pneg %p26
  $region35: #{feed_forward.1} parent=0 // pred_check_branch
    %289 = sbr.rel (%p287) target = $region37
  $region36: #{feed_forward.1} parent=0 // pred_region
    %v290 = vld [vmem:[#allocation3] sm:$0xff]
    %v291 = vld [vmem:[#allocation3 + $0x8] sm:$0xff]
    %v292 = vld [vmem:[%s6] sm:$0x1]
    %v294 = vlaneseq
    %v295 = vshrl.u32 %v294, 7
    %v296 = vsub.s32 0, %v295
    %v297 = vrot.slane %v292, %v296
    %v299 = vadd.f32 %v290, %v297
    %v300 = vadd.f32 %v291, %v297
    %301 = vst [vmem:[%s7] sm:$0xff] %v299
    %302 = vst [vmem:[%s7 + $0x8] sm:$0xff] %v300
  $region37: #{feed_forward.1} parent=0 // pred_fallthru
    _
  // Predicated region
  $region38: #{feed_forward.1} parent=0 // pred_check
    _
  $region39: #{feed_forward.1} parent=0 // pred_check_branch
    %304 = sbr.rel (0) target = $region41
  $region40: #{feed_forward.1} parent=0 // pred_region
    _
  $region41: #{feed_forward.1} parent=0 // pred_fallthru
    _
  // Predicated region
  $region42: #{feed_forward.1} parent=0 // pred_check
    _
  $region43: #{feed_forward.1} parent=0 // pred_check_branch
    %306 = sbr.rel (0) target = $region45
  $region44: #{feed_forward.1} parent=0 // pred_region
    _
  $region45: #{feed_forward.1} parent=0 // pred_fallthru
    _

</llo_original>
